<compile_context>
chip_gen: v7x
topology: tpu7x:2x2x1
jax: 0.10.0
libtpu: 0.0.40
codegen_flags: <defaults>
</compile_context>

<pallas_src>
import math

import jax
import jax.numpy as jnp
from jax.experimental import pallas as pl
from jax.experimental.pallas import tpu as pltpu


def _round_up(x, n):
    return ((x + n - 1) // n) * n


def _vmem_capacity_bytes():
    """Physical per-core VMEM; conservative fallback (v7x = 64 MiB) if unavailable."""
    try:
        return int(getattr(pltpu.get_tpu_info(), "vmem_capacity_bytes", 64 << 20))
    except Exception:
        return 64 << 20


def _choose_pack(c_out, max_pack=8):
    """Rows packed per kernel row so the stored last dim is a multiple of 128 lanes."""
    if c_out % 128 == 0:
        return 1
    pack = math.lcm(c_out, 128) // c_out
    if pack <= max_pack:
        return pack
    return 1  # fallback: masked partial stores


def _make_kernel(pack, eps, use_tanh_gelu):
    inv_sqrt2 = 1.0 / math.sqrt(2.0)
    c_tanh = math.sqrt(2.0 / math.pi)

    def kernel(x_ref, w_ref, pbg_ref, *rest):
        if pack > 1:
            a_ref, o_ref = rest
        else:
            (o_ref,) = rest

        # Linear (MXU, native-dtype operands, f32 accumulation) + bias (f32).
        y = jnp.dot(x_ref[...], w_ref[...], preferred_element_type=jnp.float32)
        y = y + pbg_ref[0:1, :]

        # GELU. Default: exact erf (matches torch.nn.GELU()). Optional tanh approx
        # (EUP slot instead of ~20 VALU ops/elem) at ~1e-3 abs error.
        if use_tanh_gelu:
            y = 0.5 * y * (1.0 + jnp.tanh(c_tanh * (y + 0.044715 * y * y * y)))
        else:
            y = 0.5 * y * (1.0 + jax.lax.erf(y * inv_sqrt2))

        # LayerNorm over each original row (= each c_out-wide lane segment), eps=1e-3.
        if pack == 1:
            mu = jnp.mean(y, axis=-1, keepdims=True)
            d = y - mu
            var = jnp.mean(d * d, axis=-1, keepdims=True)
        else:
            # A = block-diag(ones(c_out,c_out)/c_out): y @ A broadcasts each segment's
            # mean across that segment (keeps the packed layout, no in-kernel reshape).
            a = a_ref[...]
            mu = jnp.dot(y, a, preferred_element_type=jnp.float32)
            d = y - mu
            var = jnp.dot(d * d, a, preferred_element_type=jnp.float32)

        out = d * jax.lax.rsqrt(var + eps) * pbg_ref[1:2, :] + pbg_ref[2:3, :]
        # TODO(synk): dropout is identity (eval mode); training-mode dropout would need
        # pltpu.prng_seed / pltpu.prng_random_bits masking here.
        o_ref[...] = out.astype(o_ref.dtype)

    return kernel


def linlayer2(x, w, b, gamma, beta, *, tm=None, eps=1e-3, use_tanh_gelu=False):
    """LinLayer2 forward (eval mode). x: (..., C_in); w: (C_in, C_out) (stored transposed)."""
    orig_shape = x.shape
    c_in = orig_shape[-1]
    c_out = w.shape[1]
    x2 = x.reshape(-1, c_in)
    m = x2.shape[0]

    x_item = jnp.dtype(x.dtype).itemsize
    w_item = jnp.dtype(w.dtype).itemsize

    # Row-packing factor for a lane-dense (multiple-of-128) stored last dim.
    pack = _choose_pack(c_out)
    pc_in, pc_out = pack * c_in, pack * c_out

    # dtype-aware minimum sublane tile (f32: 8, bf16: 16, int8/fp8: 32).
    min_rows = {4: 8, 2: 16, 1: 32}.get(x_item, 8)

    # ---- VMEM-derived tile cap (per perf review) --------------------------------
    vmem_cap = _vmem_capacity_bytes()
    vmem_limit = int(0.75 * vmem_cap)          # ~48 MiB on v7x, ~96 MiB on v5e/v6e

    # Grid-invariant blocks (w / pbg / A) are double-buffered by the pipeline.
    fixed_bytes = 2 * pc_in * pc_out * w_item + 2 * 3 * pc_out * 4
    if pack > 1:
        fixed_bytes += 2 * pc_out * pc_out * 4
    # Per packed row: double-buffered x/out pipeline blocks + f32 temporaries the
    # compiler materializes for the GELU/LayerNorm chain (y, mu, d, d*d, var, out).
    per_row_bytes = 2 * (pc_in + pc_out) * x_item + 6 * pc_out * 4

    budget = vmem_limit - (4 << 20)            # headroom for compiler-internal scratch
    if budget > fixed_bytes:
        tm_cap = max(min_rows, (budget - fixed_bytes) // per_row_bytes)
    else:
        tm_cap = min_rows
    # Keep a single x+out pipeline buffer at <= ~6 MiB: large enough to amortize the
    # ~0.35 us per-step overhead, small enough for good overlap / megacore splitting.
    tm_buf = max(min_rows, (6 << 20) // ((pc_in + pc_out) * x_item))
    tm_eff = min(tm_cap, tm_buf)
    if tm is not None:
        tm_eff = min(tm_eff, max(min_rows, tm))

    # ---- Grid / padding ----------------------------------------------------------
    rows = -(-m // pack)                        # packed row count
    nsteps = max(1, -(-rows // tm_eff))
    if rows >= 2 * min_rows:
        nsteps = max(nsteps, 2)                 # give both v7x TensorCores work
    if nsteps > 1 and nsteps % 2:
        nsteps += 1                             # even split across megacore cores
    tile = _round_up(-(-rows // nsteps), min_rows)
    rows_pad = tile * nsteps
    m_pad = rows_pad * pack

    if m_pad != m:
        x2 = jnp.pad(x2, ((0, m_pad - m), (0, 0)))
    xp = x2.reshape(rows_pad, pc_in)            # free row-major reshape

    # Block-diagonal weight so one matmul produces `pack` packed output rows at once.
    wp = w if pack == 1 else jnp.kron(jnp.eye(pack, dtype=w.dtype), w)
    # bias / gamma / beta: one (3, pc_out) f32 array (single small DMA, f32 affine math).
    pbg = jnp.stack([
        jnp.tile(b.astype(jnp.float32), pack),
        jnp.tile(gamma.astype(jnp.float32), pack),
        jnp.tile(beta.astype(jnp.float32), pack),
    ])

    in_specs = [
        pl.BlockSpec((tile, pc_in), lambda i: (i, 0)),
        pl.BlockSpec((pc_in, pc_out), lambda i: (0, 0)),
        pl.BlockSpec((3, pc_out), lambda i: (0, 0)),
    ]
    args = [xp, wp, pbg]
    if pack > 1:
        a_mat = jnp.kron(jnp.eye(pack, dtype=jnp.float32),
                         jnp.full((c_out, c_out), 1.0 / c_out, jnp.float32))
        in_specs.append(pl.BlockSpec((pc_out, pc_out), lambda i: (0, 0)))
        args.append(a_mat)

    out = pl.pallas_call(
        _make_kernel(pack, eps, use_tanh_gelu),
        out_shape=jax.ShapeDtypeStruct((rows_pad, pc_out), x.dtype),
        grid_spec=pltpu.PrefetchScalarGridSpec(
            num_scalar_prefetch=0,
            grid=(nsteps,),
            in_specs=in_specs,
            out_specs=pl.BlockSpec((tile, pc_out), lambda i: (i, 0)),
        ),
        compiler_params=pltpu.CompilerParams(
            dimension_semantics=("parallel",),
            vmem_limit_bytes=vmem_limit,
        ),
    )(*args)

    out = out.reshape(m_pad, c_out)             # free row-major reshape (undoes packing)
    if m_pad != m:
        out = out[:m]
    return out.reshape(*orig_shape[:-1], c_out)


def _reference(x, w, b, gamma, beta, eps=1e-3):
    c_in = x.shape[-1]
    y = x.reshape(-1, c_in).astype(jnp.float32) @ w.astype(jnp.float32) + b
    y = 0.5 * y * (1.0 + jax.lax.erf(y / math.sqrt(2.0)))
    mu = y.mean(-1, keepdims=True)
    var = ((y - mu) ** 2).mean(-1, keepdims=True)
    y = (y - mu) * jax.lax.rsqrt(var + eps) * gamma + beta
    return y.reshape(*x.shape[:-1], w.shape[1]).astype(x.dtype)


def _init_params(key, in_chn, out_chn):
    # Deterministic synthetic init mimicking torch defaults:
    # Linear: U(-1/sqrt(in), 1/sqrt(in)) for weight & bias; LayerNorm: ones/zeros.
    kw, kb = jax.random.split(key)
    bound = 1.0 / math.sqrt(in_chn)
    w = jax.random.uniform(kw, (in_chn, out_chn), jnp.float32, -bound, bound)  # (C_in, C_out)
    b = jax.random.uniform(kb, (out_chn,), jnp.float32, -bound, bound)
    gamma = jnp.ones((out_chn,), jnp.float32)
    beta = jnp.zeros((out_chn,), jnp.float32)
    return w, b, gamma, beta


if __name__ == "__main__":
    key = jax.random.PRNGKey(0)
    k_x1, k_x2, k_x3, k_p1, k_p2 = jax.random.split(key, 5)

    in_chn, out_chn = 32, 64
    w, b, gamma, beta = _init_params(k_p1, in_chn, out_chn)

    # Case 1: module-like small shape (batch=2, seq=8, in_chn=32) -> out_chn=64 (pack=2).
    x1 = jax.random.normal(k_x1, (2, 8, in_chn), jnp.float32)
    y1 = linlayer2(x1, w, b, gamma, beta)
    jax.block_until_ready(y1)
    assert jnp.allclose(y1, _reference(x1, w, b, gamma, beta), atol=1e-4, rtol=1e-4)

    # Case 2: ragged row count + multi-step grid (padding, pipelining, even-step split).
    x2 = jax.random.normal(k_x2, (4, 130, in_chn), jnp.float32)
    y2 = linlayer2(x2, w, b, gamma, beta, tm=128)
    jax.block_until_ready(y2)
    assert jnp.allclose(y2, _reference(x2, w, b, gamma, beta), atol=1e-4, rtol=1e-4)

    # Case 3: out_chn=96 exercises the generalized lcm-based packing (pack=4).
    out_chn3 = 96
    w3, b3, gamma3, beta3 = _init_params(k_p2, in_chn, out_chn3)
    x3 = jax.random.normal(k_x3, (2, 50, in_chn), jnp.float32)
    y3 = linlayer2(x3, w3, b3, gamma3, beta3)
    jax.block_until_ready(y3)
    assert jnp.allclose(y3, _reference(x3, w3, b3, gamma3, beta3), atol=1e-4, rtol=1e-4)

    print("KERNEL_OK")
</pallas_src>

<mosaic_0001>
module attributes {stable_mosaic.version = 11 : i64} {
  func.func @kernel(%arg0: i32, %arg1: memref<8x64xf32, #tpu.memory_space<vmem>>, %arg2: memref<64x128xf32, #tpu.memory_space<vmem>>, %arg3: memref<3x128xf32, #tpu.memory_space<vmem>>, %arg4: memref<128x128xf32, #tpu.memory_space<vmem>>, %arg5: memref<8x128xf32, #tpu.memory_space<vmem>>) attributes {dimension_semantics = [#tpu.dimension_semantics<parallel>], iteration_bounds = array<i64: 1>, scalar_prefetch = 0 : i64, scratch_operands = 0 : i64, tpu.core_type = #tpu.core_type<tc>, window_params = [{transform_indices = @transform_0, window_bounds = array<i64: 8, 64>}, {pipeline_mode = #tpu.pipeline_mode<synchronous>, transform_indices = @transform_1, window_bounds = array<i64: 64, 128>}, {pipeline_mode = #tpu.pipeline_mode<synchronous>, transform_indices = @transform_2, window_bounds = array<i64: 3, 128>}, {pipeline_mode = #tpu.pipeline_mode<synchronous>, transform_indices = @transform_3, window_bounds = array<i64: 128, 128>}, {transform_indices = @transform_4, window_bounds = array<i64: 8, 128>}]} {
    %c0 = arith.constant 0 : index
    %c0_0 = arith.constant 0 : index
    %0 = vector.load %arg1[%c0, %c0_0] : memref<8x64xf32, #tpu.memory_space<vmem>>, vector<8x64xf32>
    %c0_1 = arith.constant 0 : index
    %c0_2 = arith.constant 0 : index
    %1 = vector.load %arg2[%c0_1, %c0_2] : memref<64x128xf32, #tpu.memory_space<vmem>>, vector<64x128xf32>
    %cst = arith.constant dense<0.000000e+00> : vector<8x128xf32>
    %2 = tpu.matmul %0, %1, %cst {dimension_numbers = #tpu.dot_dimension_numbers<[1], [0], [0], [1], [0, 0, 1, 1], [], []>} : vector<8x64xf32>, vector<64x128xf32>, vector<8x128xf32> -> vector<8x128xf32>
    %c0_3 = arith.constant 0 : index
    %c0_4 = arith.constant 0 : index
    %3 = vector.load %arg3[%c0_3, %c0_4] : memref<3x128xf32, #tpu.memory_space<vmem>>, vector<1x128xf32>
    %4 = vector.broadcast %3 : vector<1x128xf32> to vector<8x128xf32>
    %5 = arith.addf %2, %4 : vector<8x128xf32>
    %cst_5 = arith.constant 5.000000e-01 : f32
    %6 = vector.broadcast %cst_5 : f32 to vector<8x128xf32>
    %7 = arith.mulf %6, %5 : vector<8x128xf32>
    %cst_6 = arith.constant 0.707106769 : f32
    %8 = vector.broadcast %cst_6 : f32 to vector<8x128xf32>
    %9 = arith.mulf %5, %8 : vector<8x128xf32>
    %10 = math.erf %9 : vector<8x128xf32>
    %cst_7 = arith.constant 1.000000e+00 : f32
    %11 = vector.broadcast %cst_7 : f32 to vector<8x128xf32>
    %12 = arith.addf %11, %10 : vector<8x128xf32>
    %13 = arith.mulf %7, %12 : vector<8x128xf32>
    %c0_8 = arith.constant 0 : index
    %c0_9 = arith.constant 0 : index
    %14 = vector.load %arg4[%c0_8, %c0_9] : memref<128x128xf32, #tpu.memory_space<vmem>>, vector<128x128xf32>
    %cst_10 = arith.constant dense<0.000000e+00> : vector<8x128xf32>
    %15 = tpu.matmul %13, %14, %cst_10 {dimension_numbers = #tpu.dot_dimension_numbers<[1], [0], [0], [1], [0, 0, 1, 1], [], []>} : vector<8x128xf32>, vector<128x128xf32>, vector<8x128xf32> -> vector<8x128xf32>
    %16 = arith.subf %13, %15 : vector<8x128xf32>
    %17 = arith.mulf %16, %16 : vector<8x128xf32>
    %cst_11 = arith.constant dense<0.000000e+00> : vector<8x128xf32>
    %18 = tpu.matmul %17, %14, %cst_11 {dimension_numbers = #tpu.dot_dimension_numbers<[1], [0], [0], [1], [0, 0, 1, 1], [], []>} : vector<8x128xf32>, vector<128x128xf32>, vector<8x128xf32> -> vector<8x128xf32>
    %cst_12 = arith.constant 1.000000e-03 : f32
    %19 = vector.broadcast %cst_12 : f32 to vector<8x128xf32>
    %20 = arith.addf %18, %19 : vector<8x128xf32>
    %21 = math.rsqrt %20 : vector<8x128xf32>
    %22 = arith.mulf %16, %21 : vector<8x128xf32>
    %c1 = arith.constant 1 : index
    %c0_13 = arith.constant 0 : index
    %23 = vector.load %arg3[%c1, %c0_13] : memref<3x128xf32, #tpu.memory_space<vmem>>, vector<1x128xf32>
    %24 = vector.broadcast %23 : vector<1x128xf32> to vector<8x128xf32>
    %25 = arith.mulf %22, %24 : vector<8x128xf32>
    %c2 = arith.constant 2 : index
    %c0_14 = arith.constant 0 : index
    %26 = vector.load %arg3[%c2, %c0_14] : memref<3x128xf32, #tpu.memory_space<vmem>>, vector<1x128xf32>
    %27 = vector.broadcast %26 : vector<1x128xf32> to vector<8x128xf32>
    %28 = arith.addf %25, %27 : vector<8x128xf32>
    %c0_15 = arith.constant 0 : index
    %c0_16 = arith.constant 0 : index
    %29 = vector.load %arg5[%c0_15, %c0_16] : memref<8x128xf32, #tpu.memory_space<vmem>>, vector<8x128xf32>
    tpu.vector_store %arg5[%c0_15, %c0_16], %28 {strides = array<i32>} : memref<8x128xf32, #tpu.memory_space<vmem>>, vector<8x128xf32>,
    return
  }
  func.func @transform_0(%arg0: i32) -> (i32, i32) {
    %c0_i32 = arith.constant 0 : i32
    %c0_i32_0 = arith.constant 0 : i32
    return %arg0, %c0_i32 : i32, i32
  }
  func.func @transform_1(%arg0: i32) -> (i32, i32) {
    %c0_i32 = arith.constant 0 : i32
    %c0_i32_0 = arith.constant 0 : i32
    %c0_i32_1 = arith.constant 0 : i32
    return %c0_i32, %c0_i32_0 : i32, i32
  }
  func.func @transform_2(%arg0: i32) -> (i32, i32) {
    %c0_i32 = arith.constant 0 : i32
    %c0_i32_0 = arith.constant 0 : i32
    %c0_i32_1 = arith.constant 0 : i32
    return %c0_i32, %c0_i32_0 : i32, i32
  }
  func.func @transform_3(%arg0: i32) -> (i32, i32) {
    %c0_i32 = arith.constant 0 : i32
    %c0_i32_0 = arith.constant 0 : i32
    %c0_i32_1 = arith.constant 0 : i32
    return %c0_i32, %c0_i32_0 : i32, i32
  }
  func.func @transform_4(%arg0: i32) -> (i32, i32) {
    %c0_i32 = arith.constant 0 : i32
    %c0_i32_0 = arith.constant 0 : i32
    return %arg0, %c0_i32 : i32, i32
  }
}

</mosaic_0001>

<llo_original>
// kernel: tpu_custom_call.1
$region0: #{tpu_custom_call.1}
  #allocation0 [shape = 'u32[]', space=smem, size = 0x4, offset = 0x4, fixed_abs, tag = 'smem constant byte address 0x4 - core index']
  #allocation1 [shape = 'u32[144,128]{1,0:T(1,128)}', space=vmem, size = 0x12000, scoped, tag = 'internal scratch']
  %s0 = inlined_call_operand.hbm [shape: f32[8,64], index: 0, kind: input, shape index: {}]
  %s1 = inlined_call_operand.hbm [shape: f32[64,128], index: 1, kind: input, shape index: {}]
  %s2 = inlined_call_operand.vmem [shape: f32[3,128], index: 2, kind: input, shape index: {}]
  %s3 = inlined_call_operand.hbm [shape: f32[128,128], index: 3, kind: input, shape index: {}]
  %s4 = inlined_call_operand.hbm [shape: f32[8,128], index: 4, kind: output, shape index: {}]
  %s5 = sld [smem:[#allocation0]]
  $region38: #{tpu_custom_call.1} parent=0
    _
  %s7 = ssub.s32 1, %s5
  %s8 = scalar_select 0, %s7, %s5
  $region1: #{tpu_custom_call.1} parent=0
    #allocation2 [shape = 'u8[4096]{0}', space=vmem, size = 0x1000, scoped, tag = 'input window, operand 0, single buffered']
    #allocation3 [shape = 's32[1]{0}', space=sflag, size = 0x4, scoped, tag = 'scoped memory for tpu_custom_call.1']
    #allocation4 [shape = 's32[1]{0}', space=sflag, size = 0x4, scoped, tag = 'scoped memory for tpu_custom_call.1']
    #allocation5 [shape = 'u8[32768]{0}', space=vmem, size = 0x8000, scoped, tag = 'input window, operand 1, single buffered']
    #allocation6 [shape = 's32[1]{0}', space=sflag, size = 0x4, scoped, tag = 'scoped memory for tpu_custom_call.1']
    #allocation7 [shape = 'u8[65536]{0}', space=vmem, size = 0x10000, scoped, tag = 'input window, operand 3, single buffered']
    #allocation8 [shape = 'u8[4096]{0}', space=vmem, size = 0x1000, scoped, tag = 'output window, operand 0, single buffered']
    %9 = vsyncpa [#allocation3], 0
    %10 = vsyncpa [#allocation6], 0
    %11 = vsyncpa [#allocation4], 0
    // Predicated region
    $region2: #{tpu_custom_call.1} parent=1 // pred_check
      _
    $region3: #{tpu_custom_call.1} parent=1 // pred_check_branch
      %13 = sbr.rel (0) target = $region5
    $region4: #{tpu_custom_call.1} parent=1 // pred_region
      %s15 = ssub.s32 128, 128
      %16 = vsyncadd [#allocation3], %s15
      %s18 = sshll.u32 [#allocation2], 4
      %s19 = int_to_ptr.vmem [resolvable:$true] %s18
      %21 = dma.hbm_to_vmem [thread:$0]  %s0, 128, %s19, [#allocation3]
    $region5: #{tpu_custom_call.1} parent=1 // pred_fallthru
      _
    // Predicated region
    $region6: #{tpu_custom_call.1} parent=1 // pred_check
      _
    $region7: #{tpu_custom_call.1} parent=1 // pred_check_branch
      %23 = sbr.rel (0) target = $region9
    $region8: #{tpu_custom_call.1} parent=1 // pred_region
      %s25 = ssub.s32 1024, 1024
      %26 = vsyncadd [#allocation6], %s25
      %s27 = sshll.u32 [#allocation5], 4
      %s28 = int_to_ptr.vmem [resolvable:$true] %s27
      %33 = dma.hbm_to_vmem [thread:$0]  %s1, 1024, %s28, [#allocation6], 128, 128, 8
    $region9: #{tpu_custom_call.1} parent=1 // pred_fallthru
      _
    // Predicated region
    $region10: #{tpu_custom_call.1} parent=1 // pred_check
      _
    $region11: #{tpu_custom_call.1} parent=1 // pred_check_branch
      %35 = sbr.rel (0) target = $region13
    $region12: #{tpu_custom_call.1} parent=1 // pred_region
      _
    $region13: #{tpu_custom_call.1} parent=1 // pred_fallthru
      _
    // Predicated region
    $region14: #{tpu_custom_call.1} parent=1 // pred_check
      _
    $region15: #{tpu_custom_call.1} parent=1 // pred_check_branch
      %37 = sbr.rel (0) target = $region17
    $region16: #{tpu_custom_call.1} parent=1 // pred_region
      %s39 = ssub.s32 2048, 2048
      %40 = vsyncadd [#allocation6], %s39
      %s41 = sshll.u32 [#allocation7], 4
      %s42 = int_to_ptr.vmem [resolvable:$true] %s41
      %47 = dma.hbm_to_vmem [thread:$0]  %s3, 2048, %s42, [#allocation6], 128, 128, 8
    $region17: #{tpu_custom_call.1} parent=1 // pred_fallthru
      _
    // Predicated region
    $region18: #{tpu_custom_call.1} parent=1 // pred_check
      _
    $region19: #{tpu_custom_call.1} parent=1 // pred_check_branch
      %49 = sbr.rel (0) target = $region21
    $region20: #{tpu_custom_call.1} parent=1 // pred_region
      %50 = dma.done [#allocation3], 128
    $region21: #{tpu_custom_call.1} parent=1 // pred_fallthru
      _
    // Predicated region
    $region22: #{tpu_custom_call.1} parent=1 // pred_check
      _
    $region23: #{tpu_custom_call.1} parent=1 // pred_check_branch
      %52 = sbr.rel (0) target = $region25
    $region24: #{tpu_custom_call.1} parent=1 // pred_region
      %53 = dma.done [#allocation6], 1024
    $region25: #{tpu_custom_call.1} parent=1 // pred_fallthru
      _
    // Predicated region
    $region26: #{tpu_custom_call.1} parent=1 // pred_check
      _
    $region27: #{tpu_custom_call.1} parent=1 // pred_check_branch
      %55 = sbr.rel (0) target = $region29
    $region28: #{tpu_custom_call.1} parent=1 // pred_region
      %56 = dma.done [#allocation6], 2048
    $region29: #{tpu_custom_call.1} parent=1 // pred_fallthru
      _
    %v57 = vld [vmem:[#allocation2] sm:$0xff]
    %v58 = vld [vmem:[#allocation5] sm:$0xff]
    %v59 = vld [vmem:[#allocation5 + $0x8] sm:$0xff]
    %v60 = vld [vmem:[#allocation5 + $0x10] sm:$0xff]
    %v61 = vld [vmem:[#allocation5 + $0x18] sm:$0xff]
    %v62 = vld [vmem:[#allocation5 + $0x20] sm:$0xff]
    %v63 = vld [vmem:[#allocation5 + $0x28] sm:$0xff]
    %v64 = vld [vmem:[#allocation5 + $0x30] sm:$0xff]
    %v65 = vld [vmem:[#allocation5 + $0x38] sm:$0xff]
    %v66 = vld [vmem:[%s2] sm:$0x1]
    %v67 = vlaneseq
    %v68 = vshrl.u32 %v67, 7
    %v69 = vsub.s32 0, %v68
    %v70 = vrot.slane %v66, %v69
    %vm71 = vcmask 523264
    %v73 = vsel %vm71, %v57, 0
    %75 = vmatprep.subr.mxu0 0.0
    %76 = vmatpush1.msra.mxu0 %v58
    %77 = vmatprep.subr.mxu0 0.0
    %78 = vmatpush1.msra.mxu0 %v59
    %79 = vmatprep.subr.mxu0 0.0
    %80 = vmatpush1.msra.mxu0 %v60
    %81 = vmatprep.subr.mxu0 0.0
    %82 = vmatpush1.msra.mxu0 %v61
    %83 = vmatprep.subr.mxu0 0.0
    %84 = vmatpush1.msra.mxu0 %v62
    %85 = vmatprep.subr.mxu0 0.0
    %86 = vmatpush1.msra.mxu0 %v63
    %87 = vmatprep.subr.mxu0 0.0
    %88 = vmatpush1.msra.mxu0 %v64
    %89 = vmatprep.subr.mxu0 0.0
    %90 = vmatpush1.msra.mxu0 %v65
    %91 = vmatprep.subr.mxu0 0.0
    %92 = vmatpush1.msra.mxu0 0.0
    %93 = vmatprep.subr.mxu0 0.0
    %94 = vmatpush1.msra.mxu0 0.0
    %95 = vmatprep.subr.mxu0 0.0
    %96 = vmatpush1.msra.mxu0 0.0
    %97 = vmatprep.subr.mxu0 0.0
    %98 = vmatpush1.msra.mxu0 0.0
    %99 = vmatprep.subr.mxu0 0.0
    %100 = vmatpush1.msra.mxu0 0.0
    %101 = vmatprep.subr.mxu0 0.0
    %102 = vmatpush1.msra.mxu0 0.0
    %103 = vmatprep.subr.mxu0 0.0
    %104 = vmatpush1.msra.mxu0 0.0
    %105 = vmatprep.subr.mxu0 0.0
    %106 = vmatpush1.msra.mxu0 0.0
    %107 = vmatprep.subr.mxu0 0.0
    %108 = vmatpush1.msra.mxu0 0.0
    %109 = vmatprep.subr.mxu0 0.0
    %110 = vmatpush1.msra.mxu0 0.0
    %111 = vmatprep.subr.mxu0 0.0
    %112 = vmatpush1.msra.mxu0 0.0
    %113 = vmatprep.subr.mxu0 0.0
    %114 = vmatpush1.msra.mxu0 0.0
    %115 = vmatprep.subr.mxu0 0.0
    %116 = vmatpush1.msra.mxu0 0.0
    %117 = vmatprep.subr.mxu0 0.0
    %118 = vmatpush1.msra.mxu0 0.0
    %119 = vmatprep.subr.mxu0 0.0
    %120 = vmatpush1.msra.mxu0 0.0
    %121 = vmatprep.subr.mxu0 0.0
    %122 = vmatpush1.msra.mxu0 0.0
    %123 = vmatprep.subr.mxu0 0.0
    %124 = vmatpush1.msra.mxu0 0.0
    %125 = vmatprep.subr.mxu0 0.0
    %126 = vmatpush1.msra.mxu0 0.0
    %127 = vmatprep.subr.mxu0 0.0
    %128 = vmatpush1.msra.mxu0 0.0
    %129 = vmatprep.subr.mxu0 0.0
    %130 = vmatpush1.msra.mxu0 0.0
    %131 = vmatprep.subr.mxu0 0.0
    %132 = vmatpush1.msra.mxu0 0.0
    %133 = vmatprep.subr.mxu0 0.0
    %134 = vmatpush1.msra.mxu0 0.0
    %135 = vmatprep.subr.mxu0 0.0
    %136 = vmatpush1.msra.mxu0 0.0
    %137 = vmatprep.subr.mxu0 0.0
    %138 = vmatpush1.msra.mxu0 0.0
    %139 = vmatprep.mubr.f32.mxu0 0.0
    %140 = vmatmul.mubr.f32.gmra.mrb[0].mxu0 %v73
    %v141 = vpop.f32.mrb[0].mxu0
    %v142 = vadd.f32 %v70, %v141
    %v143 = vpop.f32.mrb[0].mxu0
    %144 = vdwg.mxu0
    %v145 = vmul.f32 %v142, 0.5
    %v146 = vmul.f32 %v142, 0.70710677
    %v147 = verf.f32.pop %v146
    %v148 = vadd.f32 %v147, 1.0
    %v149 = vmul.f32 %v145, %v148
    %v150 = vld [vmem:[#allocation7] sm:$0xff]
    %v151 = vld [vmem:[#allocation7 + $0x8] sm:$0xff]
    %v152 = vld [vmem:[#allocation7 + $0x10] sm:$0xff]
    %v153 = vld [vmem:[#allocation7 + $0x18] sm:$0xff]
    %v154 = vld [vmem:[#allocation7 + $0x20] sm:$0xff]
    %v155 = vld [vmem:[#allocation7 + $0x28] sm:$0xff]
    %v156 = vld [vmem:[#allocation7 + $0x30] sm:$0xff]
    %v157 = vld [vmem:[#allocation7 + $0x38] sm:$0xff]
    %v158 = vld [vmem:[#allocation7 + $0x40] sm:$0xff]
    %v159 = vld [vmem:[#allocation7 + $0x48] sm:$0xff]
    %v160 = vld [vmem:[#allocation7 + $0x50] sm:$0xff]
    %v161 = vld [vmem:[#allocation7 + $0x58] sm:$0xff]
    %v162 = vld [vmem:[#allocation7 + $0x60] sm:$0xff]
    %v163 = vld [vmem:[#allocation7 + $0x68] sm:$0xff]
    %v164 = vld [vmem:[#allocation7 + $0x70] sm:$0xff]
    %v165 = vld [vmem:[#allocation7 + $0x78] sm:$0xff]
    %166 = vmatprep.subr.mxu0 0.0
    %167 = vmatpush1.msra.mxu0 %v150
    %168 = vmatprep.subr.mxu0 0.0
    %169 = vmatpush1.msra.mxu0 %v151
    %170 = vmatprep.subr.mxu0 0.0
    %171 = vmatpush1.msra.mxu0 %v152
    %172 = vmatprep.subr.mxu0 0.0
    %173 = vmatpush1.msra.mxu0 %v153
    %174 = vmatprep.subr.mxu0 0.0
    %175 = vmatpush1.msra.mxu0 %v154
    %176 = vmatprep.subr.mxu0 0.0
    %177 = vmatpush1.msra.mxu0 %v155
    %178 = vmatprep.subr.mxu0 0.0
    %179 = vmatpush1.msra.mxu0 %v156
    %180 = vmatprep.subr.mxu0 0.0
    %181 = vmatpush1.msra.mxu0 %v157
    %182 = vmatprep.subr.mxu0 0.0
    %183 = vmatpush1.msra.mxu0 %v158
    %184 = vmatprep.subr.mxu0 0.0
    %185 = vmatpush1.msra.mxu0 %v159
    %186 = vmatprep.subr.mxu0 0.0
    %187 = vmatpush1.msra.mxu0 %v160
    %188 = vmatprep.subr.mxu0 0.0
    %189 = vmatpush1.msra.mxu0 %v161
    %190 = vmatprep.subr.mxu0 0.0
    %191 = vmatpush1.msra.mxu0 %v162
    %192 = vmatprep.subr.mxu0 0.0
    %193 = vmatpush1.msra.mxu0 %v163
    %194 = vmatprep.subr.mxu0 0.0
    %195 = vmatpush1.msra.mxu0 %v164
    %196 = vmatprep.subr.mxu0 0.0
    %197 = vmatpush1.msra.mxu0 %v165
    %198 = vmatprep.subr.mxu0 0.0
    %199 = vmatpush1.msra.mxu0 0.0
    %200 = vmatprep.subr.mxu0 0.0
    %201 = vmatpush1.msra.mxu0 0.0
    %202 = vmatprep.subr.mxu0 0.0
    %203 = vmatpush1.msra.mxu0 0.0
    %204 = vmatprep.subr.mxu0 0.0
    %205 = vmatpush1.msra.mxu0 0.0
    %206 = vmatprep.subr.mxu0 0.0
    %207 = vmatpush1.msra.mxu0 0.0
    %208 = vmatprep.subr.mxu0 0.0
    %209 = vmatpush1.msra.mxu0 0.0
    %210 = vmatprep.subr.mxu0 0.0
    %211 = vmatpush1.msra.mxu0 0.0
    %212 = vmatprep.subr.mxu0 0.0
    %213 = vmatpush1.msra.mxu0 0.0
    %214 = vmatprep.subr.mxu0 0.0
    %215 = vmatpush1.msra.mxu0 0.0
    %216 = vmatprep.subr.mxu0 0.0
    %217 = vmatpush1.msra.mxu0 0.0
    %218 = vmatprep.subr.mxu0 0.0
    %219 = vmatpush1.msra.mxu0 0.0
    %220 = vmatprep.subr.mxu0 0.0
    %221 = vmatpush1.msra.mxu0 0.0
    %222 = vmatprep.subr.mxu0 0.0
    %223 = vmatpush1.msra.mxu0 0.0
    %224 = vmatprep.subr.mxu0 0.0
    %225 = vmatpush1.msra.mxu0 0.0
    %226 = vmatprep.subr.mxu0 0.0
    %227 = vmatpush1.msra.mxu0 0.0
    %228 = vmatprep.subr.mxu0 0.0
    %229 = vmatpush1.msra.mxu0 0.0
    %230 = vmatprep.mubr.f32.mxu0 0.0
    %231 = vmatmul.mubr.f32.gmra.mrb[0].mxu0 %v149
    %v232 = vpop.f32.mrb[0].mxu0
    %v233 = vadd.f32 0.0, %v232
    %v234 = vpop.f32.mrb[0].mxu0
    %235 = vdwg.mxu0
    %v236 = vsub.f32 %v149, %v233
    %v237 = vmul.f32 %v236, %v236
    %238 = vmatprep.subr.mxu0 0.0
    %239 = vmatpush1.msra.mxu0 %v150
    %240 = vmatprep.subr.mxu0 0.0
    %241 = vmatpush1.msra.mxu0 %v151
    %242 = vmatprep.subr.mxu0 0.0
    %243 = vmatpush1.msra.mxu0 %v152
    %244 = vmatprep.subr.mxu0 0.0
    %245 = vmatpush1.msra.mxu0 %v153
    %246 = vmatprep.subr.mxu0 0.0
    %247 = vmatpush1.msra.mxu0 %v154
    %248 = vmatprep.subr.mxu0 0.0
    %249 = vmatpush1.msra.mxu0 %v155
    %250 = vmatprep.subr.mxu0 0.0
    %251 = vmatpush1.msra.mxu0 %v156
    %252 = vmatprep.subr.mxu0 0.0
    %253 = vmatpush1.msra.mxu0 %v157
    %254 = vmatprep.subr.mxu0 0.0
    %255 = vmatpush1.msra.mxu0 %v158
    %256 = vmatprep.subr.mxu0 0.0
    %257 = vmatpush1.msra.mxu0 %v159
    %258 = vmatprep.subr.mxu0 0.0
    %259 = vmatpush1.msra.mxu0 %v160
    %260 = vmatprep.subr.mxu0 0.0
    %261 = vmatpush1.msra.mxu0 %v161
    %262 = vmatprep.subr.mxu0 0.0
    %263 = vmatpush1.msra.mxu0 %v162
    %264 = vmatprep.subr.mxu0 0.0
    %265 = vmatpush1.msra.mxu0 %v163
    %266 = vmatprep.subr.mxu0 0.0
    %267 = vmatpush1.msra.mxu0 %v164
    %268 = vmatprep.subr.mxu0 0.0
    %269 = vmatpush1.msra.mxu0 %v165
    %270 = vmatprep.subr.mxu0 0.0
    %271 = vmatpush1.msra.mxu0 0.0
    %272 = vmatprep.subr.mxu0 0.0
    %273 = vmatpush1.msra.mxu0 0.0
    %274 = vmatprep.subr.mxu0 0.0
    %275 = vmatpush1.msra.mxu0 0.0
    %276 = vmatprep.subr.mxu0 0.0
    %277 = vmatpush1.msra.mxu0 0.0
    %278 = vmatprep.subr.mxu0 0.0
    %279 = vmatpush1.msra.mxu0 0.0
    %280 = vmatprep.subr.mxu0 0.0
    %281 = vmatpush1.msra.mxu0 0.0
    %282 = vmatprep.subr.mxu0 0.0
    %283 = vmatpush1.msra.mxu0 0.0
    %284 = vmatprep.subr.mxu0 0.0
    %285 = vmatpush1.msra.mxu0 0.0
    %286 = vmatprep.subr.mxu0 0.0
    %287 = vmatpush1.msra.mxu0 0.0
    %288 = vmatprep.subr.mxu0 0.0
    %289 = vmatpush1.msra.mxu0 0.0
    %290 = vmatprep.subr.mxu0 0.0
    %291 = vmatpush1.msra.mxu0 0.0
    %292 = vmatprep.subr.mxu0 0.0
    %293 = vmatpush1.msra.mxu0 0.0
    %294 = vmatprep.subr.mxu0 0.0
    %295 = vmatpush1.msra.mxu0 0.0
    %296 = vmatprep.subr.mxu0 0.0
    %297 = vmatpush1.msra.mxu0 0.0
    %298 = vmatprep.subr.mxu0 0.0
    %299 = vmatpush1.msra.mxu0 0.0
    %300 = vmatprep.subr.mxu0 0.0
    %301 = vmatpush1.msra.mxu0 0.0
    %302 = vmatprep.mubr.f32.mxu0 0.0
    %303 = vmatmul.mubr.f32.gmra.mrb[0].mxu0 %v237
    %v304 = vpop.f32.mrb[0].mxu0
    %v305 = vadd.f32 0.001, %v304
    %v306 = vpop.f32.mrb[0].mxu0
    %307 = vdwg.mxu0
    %v308 = vrsqrt.pop %v305
    %v309 = vmul.f32 %v236, %v308
    %v310 = vld [vmem:[%s2 + $0x1] sm:$0x1]
    %v311 = vlaneseq
    %v312 = vshrl.u32 %v311, 7
    %v313 = vsub.s32 0, %v312
    %v314 = vrot.slane %v310, %v313
    %v315 = vmul.f32 %v309, %v314
    %v316 = vld [vmem:[%s2 + $0x2] sm:$0x1]
    %v317 = vlaneseq
    %v318 = vshrl.u32 %v317, 7
    %v319 = vsub.s32 0, %v318
    %v320 = vrot.slane %v316, %v319
    %v321 = vadd.f32 %v315, %v320
    %322 = vst [vmem:[#allocation8] sm:$0xff] %v321
    // Predicated region
    $region30: #{tpu_custom_call.1} parent=1 // pred_check
      _
    $region31: #{tpu_custom_call.1} parent=1 // pred_check_branch
      %324 = sbr.rel (0) target = $region33
    $region32: #{tpu_custom_call.1} parent=1 // pred_region
      %s326 = ssub.s32 128, 128
      %327 = vsyncadd [#allocation4], %s326
      %s329 = sshll.u32 [#allocation8], 4
      %s330 = int_to_ptr.vmem [resolvable:$true] %s329
      %332 = dma.vmem_to_hbm [thread:$0]  %s330, 128, %s4, [#allocation4]
    $region33: #{tpu_custom_call.1} parent=1 // pred_fallthru
      _
    // Predicated region
    $region34: #{tpu_custom_call.1} parent=1 // pred_check
      _
    $region35: #{tpu_custom_call.1} parent=1 // pred_check_branch
      %334 = sbr.rel (0) target = $region37
    $region36: #{tpu_custom_call.1} parent=1 // pred_region
      %335 = dma.done [#allocation4], 128
    $region37: #{tpu_custom_call.1} parent=1 // pred_fallthru
      _
    %336 = vsyncpa [#allocation3], 1
    %337 = vsyncpa [#allocation6], 1
    %338 = vsyncpa [#allocation4], 1

</llo_original>
